<compile_context>
chip_gen: v5e
topology: v5e:2x2
jax: 0.10.0
libtpu: 0.0.40
codegen_flags: <defaults>
</compile_context>

<pallas_src>
import functools

import jax
import jax.numpy as jnp
from jax.experimental import pallas as pl
from jax.experimental.pallas import tpu as pltpu


def _round_up(v, m):
    return ((v + m - 1) // m) * m


def _vmem_capacity_bytes(default=64 * 1024 * 1024):
    """Per-core VMEM capacity; conservative 64 MiB fallback (v7x-safe)."""
    try:
        info = pltpu.get_tpu_info()
        cap = getattr(info, "vmem_capacity_bytes", None)
        if cap:
            return int(cap)
    except Exception:
        pass
    return default


def highway_kernel(x_ref, w_ref, b_ref, o_ref, *scratch,
                   hp, resident_weights, approx_sigmoid, use_scratch):
    """One (row-tile, layer) grid step of the highway recurrence."""
    l = pl.program_id(1)
    # Running activation: fp32 scratch for sub-fp32 inputs, else the resident
    # output block itself (its block index is constant along the layer axis).
    state = scratch[0] if use_scratch else o_ref

    @pl.when(l == 0)
    def _():
        state[...] = x_ref[...].astype(state.dtype)

    x = state[...].astype(jnp.float32)            # [TN, Hp]

    if resident_weights:
        w = w_ref[l]                              # [Hp, 2Hp] packed [Wt^T | Wg^T]
        b = b_ref[l]                              # [1, 2Hp]  packed [bt | bg]
    else:
        w = w_ref[...]
        b = b_ref[...]

    # Single fused MXU matmul for transform + gate, fp32 accumulation.
    y = jnp.dot(x.astype(w.dtype), w, preferred_element_type=jnp.float32)
    y = y + b.astype(jnp.float32)

    t = jnp.maximum(y[:, :hp], 0.0)               # transform branch: relu
    z = y[:, hp:]                                 # gate branch (lane-aligned split)
    if approx_sigmoid:
        g = pl.reciprocal(1.0 + jnp.exp(-z), approx=True)   # EUP exp + EUP rcp
    else:
        g = 1.0 / (1.0 + jnp.exp(-z))

    x_new = x + g * (t - x)                       # == g*t + (1-g)*x
    state[...] = x_new.astype(state.dtype)

    if use_scratch:
        @pl.when(l == pl.num_programs(1) - 1)
        def _():
            o_ref[...] = x_new.astype(o_ref.dtype)


def pack_highway_params(wt, bt, wg, bg, *, mxu_dtype=jnp.bfloat16):
    """Pack per-layer transform/gate Linears into fused, lane-aligned tensors.

    Hoist/cache this across forward calls: it reads/writes 2*L*H*H elements and
    there is no reason to redo it every step.

    Returns:
      w_packed: [L, Hp, 2*Hp]  pre-transposed [Wt^T | Wg^T], zero-padded, mxu_dtype.
      b_packed: [L, 1, 2*Hp]   [bt | bg], zero-padded, fp32.
    """
    L, H, _ = wt.shape
    Hp = _round_up(H, 128)
    pad = Hp - H

    wt_t = jnp.swapaxes(wt, 1, 2)                 # (in, out) so y = x @ W^T
    wg_t = jnp.swapaxes(wg, 1, 2)
    if pad:
        wt_t = jnp.pad(wt_t, ((0, 0), (0, pad), (0, pad)))
        wg_t = jnp.pad(wg_t, ((0, 0), (0, pad), (0, pad)))
        bt = jnp.pad(bt, ((0, 0), (0, pad)))
        bg = jnp.pad(bg, ((0, 0), (0, pad)))

    w_packed = jnp.concatenate([wt_t, wg_t], axis=-1).astype(mxu_dtype)      # [L,Hp,2Hp]
    b_packed = jnp.concatenate([bt, bg], axis=-1).astype(jnp.float32)
    b_packed = b_packed.reshape(L, 1, 2 * Hp)                                # [L,1,2Hp]
    return w_packed, b_packed


def highway_encoder_packed(x, w_packed, b_packed, *, row_tile=1024, approx_sigmoid=None):
    """Highway forward from pre-packed params (see pack_highway_params)."""
    orig_shape = x.shape
    H = orig_shape[-1]
    L, Hp, twoHp = w_packed.shape
    assert twoHp == 2 * Hp and Hp >= H

    if approx_sigmoid is None:
        approx_sigmoid = (w_packed.dtype != jnp.float32)
    use_scratch = (x.dtype != jnp.float32)

    x2d = x.reshape(-1, H)
    N = x2d.shape[0]

    x_itemsize = jnp.dtype(x.dtype).itemsize
    w_itemsize = jnp.dtype(w_packed.dtype).itemsize

    vmem_cap = _vmem_capacity_bytes()
    budget = int(0.80 * vmem_cap)

    # Weights resident in VMEM for the whole kernel when the full stack is small.
    w_total_bytes = L * Hp * 2 * Hp * w_itemsize
    resident_weights = w_total_bytes <= min(16 * 1024 * 1024, vmem_cap // 4)

    def _vmem_est(tn):
        act = 2 * 2 * tn * Hp * x_itemsize                 # in + out double-buffers
        st = tn * Hp * 4 if use_scratch else 0             # fp32 running state
        if resident_weights:
            wb = 2 * w_total_bytes                          # conservative
            bb = 2 * L * 2 * Hp * 4
        else:
            wb = 3 * Hp * 2 * Hp * w_itemsize               # Buffered(3) streaming
            bb = 3 * 2 * Hp * 4
        return act + st + wb + bb

    # Row tile: multiples of 256 (MXU tile / bf16 sublane packing), min 16.
    if N >= row_tile:
        TN = _round_up(row_tile, 256)
    else:
        TN = max(16, _round_up(N, 16))
    while TN > 16 and _vmem_est(TN) > budget:
        if TN > 256:
            TN = max(256, _round_up(TN // 2, 256))
        else:
            TN = max(16, _round_up(TN // 2, 16))

    n_pad = pl.cdiv(N, TN) * TN
    if n_pad != N or Hp != H:
        x2d = jnp.pad(x2d, ((0, n_pad - N), (0, Hp - H)))

    vmem_limit = int(min(max(int(1.25 * _vmem_est(TN)) + (2 << 20), 32 * 1024 * 1024),
                         int(0.85 * vmem_cap)))

    if resident_weights:
        w_spec = pl.BlockSpec((L, Hp, 2 * Hp), lambda r, l: (0, 0, 0))
        b_spec = pl.BlockSpec((L, 1, 2 * Hp), lambda r, l: (0, 0, 0))
    else:
        w_spec = pl.BlockSpec((None, Hp, 2 * Hp), lambda r, l: (l, 0, 0),
                              pipeline_mode=pl.Buffered(3))
        b_spec = pl.BlockSpec((None, 1, 2 * Hp), lambda r, l: (l, 0, 0))

    kernel = functools.partial(
        highway_kernel, hp=Hp, resident_weights=resident_weights,
        approx_sigmoid=approx_sigmoid, use_scratch=use_scratch)

    out2d = pl.pallas_call(
        kernel,
        out_shape=jax.ShapeDtypeStruct((n_pad, Hp), x.dtype),
        grid_spec=pltpu.PrefetchScalarGridSpec(
            num_scalar_prefetch=0,
            grid=(n_pad // TN, L),              # (row tiles, layers); layers innermost
            in_specs=[
                # Activation tile: block index constant along l -> fetched once
                # per row tile, resident across the layer recurrence.
                pl.BlockSpec((TN, Hp), lambda r, l: (r, 0)),
                w_spec,
                b_spec,
            ],
            out_specs=pl.BlockSpec((TN, Hp), lambda r, l: (r, 0)),
            scratch_shapes=([pltpu.VMEM((TN, Hp), jnp.float32)] if use_scratch else []),
        ),
        compiler_params=pltpu.CompilerParams(
            # Row tiles are independent -> parallel (megacore sharding on v7x);
            # layers are a sequential recurrence -> arbitrary.
            dimension_semantics=("parallel", "arbitrary"),
            vmem_limit_bytes=vmem_limit,
        ),
    )(x2d, w_packed, b_packed)

    return out2d[:N, :H].reshape(orig_shape)


def highway_encoder(x, wt, bt, wg, bg, *, mxu_dtype=jnp.bfloat16, row_tile=1024,
                    approx_sigmoid=None):
    """Highway encoder forward.

    Args:
      x:  [..., H] activations.
      wt, wg: [L, H, H] per-layer Linear weights in PyTorch (out, in) layout.
      bt, bg: [L, H] per-layer biases.
      mxu_dtype: dtype feeding the MXU (weights + activation operand).
      row_tile: target rows per grid tile.
    """
    w_packed, b_packed = pack_highway_params(wt, bt, wg, bg, mxu_dtype=mxu_dtype)
    return highway_encoder_packed(x, w_packed, b_packed, row_tile=row_tile,
                                  approx_sigmoid=approx_sigmoid)


def highway_encoder_ref(x, wt, bt, wg, bg):
    """Pure-JAX fp32 reference matching the PyTorch forward."""
    x = x.astype(jnp.float32)
    for l in range(wt.shape[0]):
        g = jax.nn.sigmoid(x @ wg[l].T + bg[l])
        t = jax.nn.relu(x @ wt[l].T + bt[l])
        x = g * t + (1.0 - g) * x
    return x


if __name__ == "__main__":
    num_layers = 2
    hidden_size = 32
    batch, seq = 2, 8  # x: [2, 8, 32] -> 16 rows of width 32

    key = jax.random.PRNGKey(0)
    kx, kwt, kbt, kwg, kbg = jax.random.split(key, 5)

    x = jax.random.normal(kx, (batch, seq, hidden_size), dtype=jnp.float32)
    # nn.Linear(hidden, hidden) per layer: weight [H, H] (out, in), bias [H]; stacked over layers.
    wt = 0.1 * jax.random.normal(kwt, (num_layers, hidden_size, hidden_size), jnp.float32)
    bt = 0.1 * jax.random.normal(kbt, (num_layers, hidden_size), jnp.float32)
    wg = 0.1 * jax.random.normal(kwg, (num_layers, hidden_size, hidden_size), jnp.float32)
    bg = 0.1 * jax.random.normal(kbg, (num_layers, hidden_size), jnp.float32)

    ref = highway_encoder_ref(x.reshape(-1, hidden_size), wt, bt, wg, bg).reshape(x.shape)

    # fp32 MXU path + exact sigmoid: tight tolerance vs fp32 reference.
    out_f32 = jax.block_until_ready(
        highway_encoder(x, wt, bt, wg, bg, mxu_dtype=jnp.float32)
    )
    assert out_f32.shape == x.shape and out_f32.dtype == x.dtype
    assert jnp.allclose(out_f32, ref, atol=1e-5, rtol=1e-5), "fp32 path mismatch vs reference"

    # Default fast path (bf16-fed MXU, approx-reciprocal sigmoid, fp32 running state).
    out_fast = jax.block_until_ready(highway_encoder(x, wt, bt, wg, bg))
    assert out_fast.shape == x.shape and out_fast.dtype == x.dtype
    assert jnp.allclose(out_fast, ref, atol=3e-2, rtol=3e-2), "fast path mismatch vs reference"

    # bf16-input path: exercises the fp32 VMEM scratch running state.
    x_bf16 = x.astype(jnp.bfloat16)
    ref_bf16 = highway_encoder_ref(
        x_bf16.astype(jnp.float32).reshape(-1, hidden_size), wt, bt, wg, bg
    ).reshape(x.shape)
    out_bf16 = jax.block_until_ready(highway_encoder(x_bf16, wt, bt, wg, bg))
    assert out_bf16.shape == x.shape and out_bf16.dtype == jnp.bfloat16
    assert jnp.allclose(out_bf16.astype(jnp.float32), ref_bf16, atol=5e-2, rtol=5e-2), \
        "bf16-input path mismatch vs reference"

    print("KERNEL_OK")
</pallas_src>

<mosaic_0001>
module attributes {stable_mosaic.version = 11 : i64} {
  func.func @highway_kernel(%arg0: i32, %arg1: i32, %arg2: memref<16x128xf32, #tpu.memory_space<vmem>>, %arg3: memref<2x128x256xf32, #tpu.memory_space<vmem>>, %arg4: memref<2x1x256xf32, #tpu.memory_space<vmem>>, %arg5: memref<16x128xf32, #tpu.memory_space<vmem>>) attributes {dimension_semantics = [#tpu.dimension_semantics<parallel>, #tpu.dimension_semantics<arbitrary>], iteration_bounds = array<i64: 1, 2>, scalar_prefetch = 0 : i64, scratch_operands = 0 : i64, tpu.core_type = #tpu.core_type<tc>, window_params = [{transform_indices = @transform_0, window_bounds = array<i64: 16, 128>}, {pipeline_mode = #tpu.pipeline_mode<synchronous>, transform_indices = @transform_1, window_bounds = array<i64: 2, 128, 256>}, {pipeline_mode = #tpu.pipeline_mode<synchronous>, transform_indices = @transform_2, window_bounds = array<i64: 2, 1, 256>}, {transform_indices = @transform_3, window_bounds = array<i64: 16, 128>}]} {
    %c0_i32 = arith.constant 0 : i32
    %0 = arith.cmpi eq, %arg1, %c0_i32 : i32
    %1 = arith.extui %0 : i1 to i32
    %c0_i32_0 = arith.constant 0 : i32
    %2 = arith.cmpi ne, %1, %c0_i32_0 : i32
    scf.if %2 {
      %c0_12 = arith.constant 0 : index
      %c0_13 = arith.constant 0 : index
      %28 = vector.load %arg2[%c0_12, %c0_13] : memref<16x128xf32, #tpu.memory_space<vmem>>, vector<16x128xf32>
      %c0_14 = arith.constant 0 : index
      %c0_15 = arith.constant 0 : index
      %29 = vector.load %arg5[%c0_14, %c0_15] : memref<16x128xf32, #tpu.memory_space<vmem>>, vector<16x128xf32>
      tpu.vector_store %arg5[%c0_14, %c0_15], %28 {strides = array<i32>} : memref<16x128xf32, #tpu.memory_space<vmem>>, vector<16x128xf32>,
    } else {
    }
    %c0 = arith.constant 0 : index
    %c0_1 = arith.constant 0 : index
    %3 = vector.load %arg5[%c0, %c0_1] : memref<16x128xf32, #tpu.memory_space<vmem>>, vector<16x128xf32>
    %4 = arith.index_cast %arg1 : i32 to index
    %c0_2 = arith.constant 0 : index
    %c0_3 = arith.constant 0 : index
    %5 = vector.load %arg3[%4, %c0_2, %c0_3] : memref<2x128x256xf32, #tpu.memory_space<vmem>>, vector<1x128x256xf32>
    %6 = vector.shape_cast %5 : vector<1x128x256xf32> to vector<128x256xf32>
    %7 = arith.index_cast %arg1 : i32 to index
    %c0_4 = arith.constant 0 : index
    %c0_5 = arith.constant 0 : index
    %8 = vector.load %arg4[%7, %c0_4, %c0_5] : memref<2x1x256xf32, #tpu.memory_space<vmem>>, vector<1x1x256xf32>
    %9 = vector.shape_cast %8 : vector<1x1x256xf32> to vector<1x256xf32>
    %cst = arith.constant dense<0.000000e+00> : vector<16x256xf32>
    %10 = tpu.matmul %3, %6, %cst {dimension_numbers = #tpu.dot_dimension_numbers<[1], [0], [0], [1], [0, 0, 1, 1], [], []>} : vector<16x128xf32>, vector<128x256xf32>, vector<16x256xf32> -> vector<16x256xf32>
    %11 = vector.broadcast %9 : vector<1x256xf32> to vector<16x256xf32>
    %12 = arith.addf %10, %11 : vector<16x256xf32>
    %13 = vector.extract_strided_slice %12 {offsets = [0, 0], sizes = [16, 128], strides = [1, 1]} : vector<16x256xf32> to vector<16x128xf32>
    %cst_6 = arith.constant 0.000000e+00 : f32
    %14 = vector.broadcast %cst_6 : f32 to vector<16x128xf32>
    %15 = arith.maximumf %13, %14 : vector<16x128xf32>
    %16 = vector.extract_strided_slice %12 {offsets = [0, 128], sizes = [16, 128], strides = [1, 1]} : vector<16x256xf32> to vector<16x128xf32>
    %cst_7 = arith.constant 0.000000e+00 : f32
    %17 = vector.broadcast %cst_7 : f32 to vector<16x128xf32>
    %18 = arith.subf %17, %16 : vector<16x128xf32>
    %19 = math.exp %18 : vector<16x128xf32>
    %cst_8 = arith.constant 1.000000e+00 : f32
    %20 = vector.broadcast %cst_8 : f32 to vector<16x128xf32>
    %21 = arith.addf %20, %19 : vector<16x128xf32>
    %cst_9 = arith.constant 1.000000e+00 : f32
    %22 = vector.broadcast %cst_9 : f32 to vector<16x128xf32>
    %23 = arith.divf %22, %21 : vector<16x128xf32>
    %24 = arith.subf %15, %3 : vector<16x128xf32>
    %25 = arith.mulf %23, %24 : vector<16x128xf32>
    %26 = arith.addf %3, %25 : vector<16x128xf32>
    %c0_10 = arith.constant 0 : index
    %c0_11 = arith.constant 0 : index
    %27 = vector.load %arg5[%c0_10, %c0_11] : memref<16x128xf32, #tpu.memory_space<vmem>>, vector<16x128xf32>
    tpu.vector_store %arg5[%c0_10, %c0_11], %26 {strides = array<i32>} : memref<16x128xf32, #tpu.memory_space<vmem>>, vector<16x128xf32>,
    return
  }
  func.func @transform_0(%arg0: i32, %arg1: i32) -> (i32, i32) {
    %c0_i32 = arith.constant 0 : i32
    %c0_i32_0 = arith.constant 0 : i32
    return %arg0, %c0_i32 : i32, i32
  }
  func.func @transform_1(%arg0: i32, %arg1: i32) -> (i32, i32, i32) {
    %c0_i32 = arith.constant 0 : i32
    %c0_i32_0 = arith.constant 0 : i32
    %c0_i32_1 = arith.constant 0 : i32
    %c0_i32_2 = arith.constant 0 : i32
    return %c0_i32, %c0_i32_0, %c0_i32_1 : i32, i32, i32
  }
  func.func @transform_2(%arg0: i32, %arg1: i32) -> (i32, i32, i32) {
    %c0_i32 = arith.constant 0 : i32
    %c0_i32_0 = arith.constant 0 : i32
    %c0_i32_1 = arith.constant 0 : i32
    %c0_i32_2 = arith.constant 0 : i32
    return %c0_i32, %c0_i32_0, %c0_i32_1 : i32, i32, i32
  }
  func.func @transform_3(%arg0: i32, %arg1: i32) -> (i32, i32) {
    %c0_i32 = arith.constant 0 : i32
    %c0_i32_0 = arith.constant 0 : i32
    return %arg0, %c0_i32 : i32, i32
  }
}

</mosaic_0001>

<llo_original>
// kernel: tpu_custom_call.1
$region0: #{tpu_custom_call.1}
  #allocation0 [shape = 'u32[]', space=smem, size = 0x4, offset = 0x4, fixed_abs, tag = 'smem constant byte address 0x4 - core index']
  #allocation1 [shape = 'u32[72,128]{1,0:T(1,128)}', space=vmem, size = 0x9000, scoped, tag = 'internal scratch']
  %s0 = inlined_call_operand.hbm [shape: f32[16,128], index: 0, kind: input, shape index: {}]
  %s1 = inlined_call_operand.hbm [shape: f32[2,128,256], index: 1, kind: input, shape index: {}]
  %s2 = inlined_call_operand.hbm [shape: f32[2,1,256], index: 2, kind: input, shape index: {}]
  %s3 = inlined_call_operand.hbm [shape: f32[16,128], index: 3, kind: output, shape index: {}]
  %s4 = sld [smem:[#allocation0]]
  $region61: #{tpu_custom_call.1} parent=0
    _
  %s6 = ssub.s32 1, %s4
  %s7 = scalar_select 0, %s6, %s4
  $region1: #{tpu_custom_call.1} parent=0
    #allocation2 [shape = 'u8[8192]{0}', space=vmem, size = 0x2000, scoped, tag = 'input window, operand 0, single buffered']
    #allocation3 [shape = 's32[2]{0}', space=sflag, size = 0x8, scoped, tag = 'scoped memory for tpu_custom_call.1']
    #allocation4 [shape = 's32[2]{0}', space=sflag, size = 0x8, scoped, tag = 'scoped memory for tpu_custom_call.1']
    #allocation5 [shape = 'u8[262144]{0}', space=vmem, size = 0x40000, scoped, tag = 'input window, operand 1, single buffered']
    #allocation6 [shape = 's32[1]{0}', space=sflag, size = 0x4, scoped, tag = 'scoped memory for tpu_custom_call.1']
    #allocation7 [shape = 'u8[2048]{0}', space=vmem, size = 0x800, scoped, tag = 'input window, operand 2, single buffered']
    #allocation8 [shape = 'u8[8192]{0}', space=vmem, size = 0x2000, scoped, tag = 'output window, operand 0, single buffered']
    %8 = vsyncpa [#allocation3], 0
    %9 = vsyncpa [#allocation6], 0
    %10 = vsyncpa [#allocation4], 0
    loop: start=0, step=1, limit=4
    $region2: #{tpu_custom_call.1} parent=1 // loop_pre_header
      _
    $region3: #{tpu_custom_call.1} parent=1 // loop_header
      %s12 = sphi 0, %s16
      %p13 = scmp.ge.s32.totalorder %s12, 4
      %s19 = sphi 0, %s31
      %s20 = sphi 0, %s27
      %s21 = sphi 0, %s19
      %s22 = sphi 0, %s20
      %s23 = sphi 0, %s21
      %s24 = sphi 0, %s22
      %s34 = sphi 0, %s36
      %s37 = sphi 0, %s34
      %s38 = sphi 0, %s37
      %s54 = sphi 0, %s38
      %s58 = sphi 0, %s58
      %s60 = sphi 0, %s58
      %s61 = sphi 0, %s60
      %s75 = sphi 0, %s61
      %s79 = sphi 0, %s79
      %s81 = sphi 0, %s79
      %s82 = sphi 0, %s81
      %s96 = sphi 0, %s82
      %s102 = sphi 0, %s104
      %s105 = sphi 0, %s102
      %s106 = sphi 0, %s105
      %s122 = sphi 0, %s106
    $region4: #{tpu_custom_call.1} parent=1 // loop_header_branch
      %15 = sbr.rel (%p13) target = $region8
    $region5: #{tpu_custom_call.1} parent=1 // loop_body
      %s17 = ssub.s32 %s12, 1
      %s18 = ssub.s32 %s12, 2
      %s25 = sadd.s32 1, %s20
      %p26 = scmp.ge.s32.totalorder %s25, 2
      %s27 = scalar_select %p26, 0, %s25
      %s28 = sadd.s32 1, %s19
      %s29 = scalar_select %p26, %s28, %s19
      %p30 = scmp.ge.s32.totalorder %s29, 1
      %s31 = scalar_select %p30, 0, %s29
      %s32 = ssub.s32 %s19, %s31
      %p33 = scmp.eq.s32.totalorder %s32, 0
      %s35 = sadd.s32 %s34, 1
      %s36 = scalar_select %p33, %s34, %s35
      %p39 = pneg %p33
      %p40 = scmp.eq.s32.totalorder %s12, 1
      %p41 = por %p39, %p40
      %p42 = scmp.ne.s32.totalorder %s34, %s37
      %p43 = scmp.eq.s32.totalorder %s12, 0
      %p44 = por %p42, %p43
      %p45 = scmp.ne.s32.totalorder %s34, %s37
      %p46 = scmp.eq.s32.totalorder %s17, 1
      %p47 = por %p45, %p46
      %p48 = scmp.ne.s32.totalorder %s37, %s38
      %p49 = scmp.eq.s32.totalorder %s17, 0
      %p50 = por %p48, %p49
      %p51 = scmp.ne.s32.totalorder %s37, %s38
      %p52 = scmp.eq.s32.totalorder %s18, 1
      %p53 = por %p51, %p52
      %p55 = scmp.ne.s32.totalorder %s38, %s54
      %p56 = scmp.eq.s32.totalorder %s18, 0
      %p57 = por %p55, %p56
      %s59 = sadd.s32 %s58, 1
      %p62 = scmp.eq.s32.totalorder %s12, 1
      %p63 = scmp.ne.s32.totalorder %s58, %s60
      %p64 = scmp.eq.s32.totalorder %s12, 0
      %p65 = por %p63, %p64
      %p66 = scmp.ne.s32.totalorder %s58, %s60
      %p67 = scmp.eq.s32.totalorder %s17, 1
      %p68 = por %p66, %p67
      %p69 = scmp.ne.s32.totalorder %s60, %s61
      %p70 = scmp.eq.s32.totalorder %s17, 0
      %p71 = por %p69, %p70
      %p72 = scmp.ne.s32.totalorder %s60, %s61
      %p73 = scmp.eq.s32.totalorder %s18, 1
      %p74 = por %p72, %p73
      %p76 = scmp.ne.s32.totalorder %s61, %s75
      %p77 = scmp.eq.s32.totalorder %s18, 0
      %p78 = por %p76, %p77
      %s80 = sadd.s32 %s79, 1
      %p83 = scmp.eq.s32.totalorder %s12, 1
      %p84 = scmp.ne.s32.totalorder %s79, %s81
      %p85 = scmp.eq.s32.totalorder %s12, 0
      %p86 = por %p84, %p85
      %p87 = scmp.ne.s32.totalorder %s79, %s81
      %p88 = scmp.eq.s32.totalorder %s17, 1
      %p89 = por %p87, %p88
      %p90 = scmp.ne.s32.totalorder %s81, %s82
      %p91 = scmp.eq.s32.totalorder %s17, 0
      %p92 = por %p90, %p91
      %p93 = scmp.ne.s32.totalorder %s81, %s82
      %p94 = scmp.eq.s32.totalorder %s18, 1
      %p95 = por %p93, %p94
      %p97 = scmp.ne.s32.totalorder %s82, %s96
      %p98 = scmp.eq.s32.totalorder %s18, 0
      %p99 = por %p97, %p98
      %s100 = ssub.s32 %s19, %s31
      %p101 = scmp.eq.s32.totalorder %s100, 0
      %s103 = sadd.s32 %s102, 1
      %s104 = scalar_select %p101, %s102, %s103
      %p107 = pneg %p101
      %p108 = scmp.eq.s32.totalorder %s12, 1
      %p109 = por %p107, %p108
      %p110 = scmp.ne.s32.totalorder %s102, %s105
      %p111 = scmp.eq.s32.totalorder %s12, 0
      %p112 = por %p110, %p111
      %p113 = scmp.ne.s32.totalorder %s102, %s105
      %p114 = scmp.eq.s32.totalorder %s17, 1
      %p115 = por %p113, %p114
      %p116 = scmp.ne.s32.totalorder %s105, %s106
      %p117 = scmp.eq.s32.totalorder %s17, 0
      %p118 = por %p116, %p117
      %p119 = scmp.ne.s32.totalorder %s105, %s106
      %p120 = scmp.eq.s32.totalorder %s18, 1
      %p121 = por %p119, %p120
      %p123 = scmp.ne.s32.totalorder %s106, %s122
      %p124 = scmp.eq.s32.totalorder %s18, 0
      %p125 = por %p123, %p124
      %p126 = scmp.le.s32.totalorder 1, %s12
      %p127 = scmp.lt.s32.totalorder %s12, 3
      %p128 = pnand %p126, %p127
      %p129 = pneg %p128
      // Predicated region
      $region9: #{tpu_custom_call.1} parent=5 // pred_check
        _
      $region10: #{tpu_custom_call.1} parent=5 // pred_check_branch
        %131 = sbr.rel (%p128) target = $region12
      $region11: #{tpu_custom_call.1} parent=5 // pred_region
        %s132 = ssub.s32 %s12, 1
        // Predicated region
        $region13: #{tpu_custom_call.1} parent=11 // pred_check
          %p133 = pneg %p50
        $region14: #{tpu_custom_call.1} parent=11 // pred_check_branch
          %135 = sbr.rel (%p133) target = $region16
        $region15: #{tpu_custom_call.1} parent=11 // pred_region
          %s136 = smul.u32 2, %s21
          %138 = vsyncadd [#allocation3], 0
          %s139 = smul.addr %s136, 8
          %s140 = scalar_lea.hbm %s0, %s139
          %s141 = sshll.u32 %s140, 4
          %s142 = int_to_ptr.hbm [resolvable:$true] %s141
          %s143 = sshll.u32 [#allocation2], 4
          %s144 = int_to_ptr.vmem [resolvable:$true] %s143
          %149 = dma.hbm_to_vmem [thread:$0]  %s142, 256, %s144, [#allocation3], 128, 128, 8
        $region16: #{tpu_custom_call.1} parent=11 // pred_fallthru
          _
        // Predicated region
        $region17: #{tpu_custom_call.1} parent=11 // pred_check
          %p150 = pneg %p71
        $region18: #{tpu_custom_call.1} parent=11 // pred_check_branch
          %152 = sbr.rel (%p150) target = $region20
        $region19: #{tpu_custom_call.1} parent=11 // pred_region
          %154 = vsyncadd [#allocation6], 0
          %s155 = sshll.u32 %s1, 4
          %s156 = int_to_ptr.hbm [resolvable:$true] %s155
          %s157 = sshll.u32 [#allocation5], 4
          %s158 = int_to_ptr.vmem [resolvable:$true] %s157
          %163 = dma.hbm_to_vmem [thread:$0]  %s156, 8192, %s158, [#allocation6], 256, 256, 16
        $region20: #{tpu_custom_call.1} parent=11 // pred_fallthru
          _
        // Predicated region
        $region21: #{tpu_custom_call.1} parent=11 // pred_check
          %p164 = pneg %p92
        $region22: #{tpu_custom_call.1} parent=11 // pred_check_branch
          %166 = sbr.rel (%p164) target = $region24
        $region23: #{tpu_custom_call.1} parent=11 // pred_region
          %168 = vsyncadd [#allocation6], 0
          %s169 = sshll.u32 %s2, 4
          %s170 = int_to_ptr.hbm [resolvable:$true] %s169
          %s171 = sshll.u32 [#allocation7], 4
          %s172 = int_to_ptr.vmem [resolvable:$true] %s171
          %177 = dma.hbm_to_vmem [thread:$0]  %s170, 64, %s172, [#allocation6], 32, 32, 2
        $region24: #{tpu_custom_call.1} parent=11 // pred_fallthru
          _
      $region12: #{tpu_custom_call.1} parent=5 // pred_fallthru
        _
      %p178 = scmp.lt.s32.totalorder %s12, 2
      // Predicated region
      $region25: #{tpu_custom_call.1} parent=5 // pred_check
        %p179 = pneg %p178
      $region26: #{tpu_custom_call.1} parent=5 // pred_check_branch
        %181 = sbr.rel (%p179) target = $region28
      $region27: #{tpu_custom_call.1} parent=5 // pred_region
        _
      $region28: #{tpu_custom_call.1} parent=5 // pred_fallthru
        _
      %p182 = scmp.le.s32.totalorder 1, %s12
      %p183 = scmp.lt.s32.totalorder %s12, 3
      %p184 = pnand %p182, %p183
      %p185 = pneg %p184
      // Predicated region
      $region29: #{tpu_custom_call.1} parent=5 // pred_check
        _
      $region30: #{tpu_custom_call.1} parent=5 // pred_check_branch
        %187 = sbr.rel (%p184) target = $region32
      $region31: #{tpu_custom_call.1} parent=5 // pred_region
        %s188 = ssub.s32 %s12, 1
        // Predicated region
        $region33: #{tpu_custom_call.1} parent=31 // pred_check
          %p189 = pneg %p50
        $region34: #{tpu_custom_call.1} parent=31 // pred_check_branch
          %191 = sbr.rel (%p189) target = $region36
        $region35: #{tpu_custom_call.1} parent=31 // pred_region
          %193 = dma.done [#allocation3], 256
        $region36: #{tpu_custom_call.1} parent=31 // pred_fallthru
          _
        // Predicated region
        $region37: #{tpu_custom_call.1} parent=31 // pred_check
          %p194 = pneg %p71
        $region38: #{tpu_custom_call.1} parent=31 // pred_check_branch
          %196 = sbr.rel (%p194) target = $region40
        $region39: #{tpu_custom_call.1} parent=31 // pred_region
          %198 = dma.done [#allocation6], 8192
        $region40: #{tpu_custom_call.1} parent=31 // pred_fallthru
          _
        // Predicated region
        $region41: #{tpu_custom_call.1} parent=31 // pred_check
          %p199 = pneg %p92
        $region42: #{tpu_custom_call.1} parent=31 // pred_check_branch
          %201 = sbr.rel (%p199) target = $region44
        $region43: #{tpu_custom_call.1} parent=31 // pred_region
          %203 = dma.done [#allocation6], 64
        $region44: #{tpu_custom_call.1} parent=31 // pred_fallthru
          _
        %p204 = pneg %p50
        %p205 = pneg %p47
        %p206 = pneg %p71
        %p207 = pneg %p68
        %p208 = pneg %p92
        %p209 = pneg %p89
        %p210 = pneg %p118
        %p211 = pneg %p115
        %s212 = smul.u32 2, %s21
        %s213 = smul.u32 2, %s21
        %p214 = scmp.eq.s32.totalorder %s22, 0
        // Predicated region
        $region45: #{tpu_custom_call.1} parent=31 // pred_check
          %p215 = pneg %p214
        $region46: #{tpu_custom_call.1} parent=31 // pred_check_branch
          %217 = sbr.rel (%p215) target = $region48
        $region47: #{tpu_custom_call.1} parent=31 // pred_region
          %v218 = vld [vmem:[#allocation2] sm:$0xff]
          %v219 = vld [vmem:[#allocation2 + $0x8] sm:$0xff]
          %220 = vst [vmem:[#allocation8] sm:$0xff] %v218
          %221 = vst [vmem:[#allocation8 + $0x8] sm:$0xff] %v219
        $region48: #{tpu_custom_call.1} parent=31 // pred_fallthru
          _
        %v222 = vld [vmem:[#allocation8] sm:$0xff]
        %v223 = vld [vmem:[#allocation8 + $0x8] sm:$0xff]
        %s224 = smul.u32 %s22, 32
        %s225 = smul.addr %s224, 8
        %s226 = scalar_lea.vmem [#allocation5], %s225
        %v227 = vld [vmem:[%s226] sm:$0xff]
        %v228 = vld [vmem:[%s226 + $0x8] sm:$0xff]
        %v229 = vld [vmem:[%s226 + $0x10] sm:$0xff]
        %v230 = vld [vmem:[%s226 + $0x18] sm:$0xff]
        %v231 = vld [vmem:[%s226 + $0x20] sm:$0xff]
        %v232 = vld [vmem:[%s226 + $0x28] sm:$0xff]
        %v233 = vld [vmem:[%s226 + $0x30] sm:$0xff]
        %v234 = vld [vmem:[%s226 + $0x38] sm:$0xff]
        %v235 = vld [vmem:[%s226 + $0x40] sm:$0xff]
        %v236 = vld [vmem:[%s226 + $0x48] sm:$0xff]
        %v237 = vld [vmem:[%s226 + $0x50] sm:$0xff]
        %v238 = vld [vmem:[%s226 + $0x58] sm:$0xff]
        %v239 = vld [vmem:[%s226 + $0x60] sm:$0xff]
        %v240 = vld [vmem:[%s226 + $0x68] sm:$0xff]
        %v241 = vld [vmem:[%s226 + $0x70] sm:$0xff]
        %v242 = vld [vmem:[%s226 + $0x78] sm:$0xff]
        %v243 = vld [vmem:[%s226 + $0x80] sm:$0xff]
        %v244 = vld [vmem:[%s226 + $0x88] sm:$0xff]
        %v245 = vld [vmem:[%s226 + $0x90] sm:$0xff]
        %v246 = vld [vmem:[%s226 + $0x98] sm:$0xff]
        %v247 = vld [vmem:[%s226 + $0xa0] sm:$0xff]
        %v248 = vld [vmem:[%s226 + $0xa8] sm:$0xff]
        %v249 = vld [vmem:[%s226 + $0xb0] sm:$0xff]
        %v250 = vld [vmem:[%s226 + $0xb8] sm:$0xff]
        %v251 = vld [vmem:[%s226 + $0xc0] sm:$0xff]
        %v252 = vld [vmem:[%s226 + $0xc8] sm:$0xff]
        %v253 = vld [vmem:[%s226 + $0xd0] sm:$0xff]
        %v254 = vld [vmem:[%s226 + $0xd8] sm:$0xff]
        %v255 = vld [vmem:[%s226 + $0xe0] sm:$0xff]
        %v256 = vld [vmem:[%s226 + $0xe8] sm:$0xff]
        %v257 = vld [vmem:[%s226 + $0xf0] sm:$0xff]
        %v258 = vld [vmem:[%s226 + $0xf8] sm:$0xff]
        %s259 = smul.u32 %s22, 2
        %s260 = scalar_lea.vmem [#allocation7], %s259
        %v261 = vld [vmem:[%s260] sm:$0x3]
        %v263 = vperm.slane %v261, 0
        %v264 = vperm.slane %v261, 1
        %267 = vmatpush.msra.mxu0 %v257
        %268 = vmatpush.msra.mxu0 %v255
        %269 = vmatpush.msra.mxu0 %v253
        %270 = vmatpush.msra.mxu0 %v251
        %271 = vmatpush.msra.mxu0 %v249
        %272 = vmatpush.msra.mxu0 %v247
        %273 = vmatpush.msra.mxu0 %v245
        %274 = vmatpush.msra.mxu0 %v243
        %275 = vmatpush.msra.mxu0 %v241
        %276 = vmatpush.msra.mxu0 %v239
        %277 = vmatpush.msra.mxu0 %v237
        %278 = vmatpush.msra.mxu0 %v235
        %279 = vmatpush.msra.mxu0 %v233
        %280 = vmatpush.msra.mxu0 %v231
        %281 = vmatpush.msra.mxu0 %v229
        %282 = vmatpush.msra.mxu0 %v227
        %283 = vmatmul.f32.gmra.mxu0 %v222
        %v284 = vpop.f32.mrf.mxu0
        %v285 = vadd.f32 %v263, %v284
        %286 = vmatmul.f32.gmra.mxu0 %v223
        %v287 = vpop.f32.mrf.mxu0
        %v288 = vadd.f32 %v263, %v287
        %289 = vdwg.mxu0
        %290 = vmatpush.msra.mxu0 %v258
        %291 = vmatpush.msra.mxu0 %v256
        %292 = vmatpush.msra.mxu0 %v254
        %293 = vmatpush.msra.mxu0 %v252
        %294 = vmatpush.msra.mxu0 %v250
        %295 = vmatpush.msra.mxu0 %v248
        %296 = vmatpush.msra.mxu0 %v246
        %297 = vmatpush.msra.mxu0 %v244
        %298 = vmatpush.msra.mxu0 %v242
        %299 = vmatpush.msra.mxu0 %v240
        %300 = vmatpush.msra.mxu0 %v238
        %301 = vmatpush.msra.mxu0 %v236
        %302 = vmatpush.msra.mxu0 %v234
        %303 = vmatpush.msra.mxu0 %v232
        %304 = vmatpush.msra.mxu0 %v230
        %305 = vmatpush.msra.mxu0 %v228
        %306 = vmatmul.f32.gmra.mxu0 %v222
        %v307 = vpop.f32.mrf.mxu0
        %v308 = vadd.f32 %v264, %v307
        %309 = vmatmul.f32.gmra.mxu0 %v223
        %v310 = vpop.f32.mrf.mxu0
        %v311 = vadd.f32 %v264, %v310
        %312 = vdwg.mxu0
        %v313 = vmax.f32 %v285, 0.0
        %v314 = vmax.f32 %v288, 0.0
        %v315 = vsub.f32 0.0, %v308
        %v316 = vsub.f32 0.0, %v311
        %v317 = vmul.f32 %v315, 1.442695
        %v318 = vpow.pop %v317
        %v319 = vmul.f32 %v316, 1.442695
        %v320 = vpow.pop %v319
        %v321 = vadd.f32 %v318, 1.0
        %v322 = vadd.f32 %v320, 1.0
        %v323 = vrcp.pop %v321
        %v324 = vmul.f32 %v321, %v323
        %v325 = vsub.f32 1.0, %v324
        %v326 = vmul.f32 %v323, %v325
        %v327 = vadd.f32 %v323, %v326
        %vm328 = vweird.f32 %v321
        %vm329 = vweird.f32 %v323
        %vm330 = vmor %vm328, %vm329
        %v331 = vsel %vm330, %v323, %v327
        %v332 = vand.u32 2147483647, %v321
        %vm333 = vcmp.eq.f32.partialorder %v332, 8.507059e+37
        %v334 = vand.u32 %v321, 2147483648
        %v335 = vor.u32 1.1754944e-38, %v334
        %v336 = vsel %vm333, %v335, %v331
        %v337 = vmul.f32 1.0, %v336
        %v338 = vrcp.pop %v322
        %v339 = vmul.f32 %v322, %v338
        %v340 = vsub.f32 1.0, %v339
        %v341 = vmul.f32 %v338, %v340
        %v342 = vadd.f32 %v338, %v341
        %vm343 = vweird.f32 %v322
        %vm344 = vweird.f32 %v338
        %vm345 = vmor %vm343, %vm344
        %v346 = vsel %vm345, %v338, %v342
        %v347 = vand.u32 2147483647, %v322
        %vm348 = vcmp.eq.f32.partialorder %v347, 8.507059e+37
        %v349 = vand.u32 %v322, 2147483648
        %v350 = vor.u32 1.1754944e-38, %v349
        %v351 = vsel %vm348, %v350, %v346
        %v352 = vmul.f32 1.0, %v351
        %v353 = vsub.f32 %v313, %v222
        %v354 = vsub.f32 %v314, %v223
        %v355 = vmul.f32 %v337, %v353
        %v356 = vmul.f32 %v352, %v354
        %v357 = vadd.f32 %v222, %v355
        %v358 = vadd.f32 %v223, %v356
        %359 = vst [vmem:[#allocation8] sm:$0xff] %v357
        %360 = vst [vmem:[#allocation8 + $0x8] sm:$0xff] %v358
        // Predicated region
        $region49: #{tpu_custom_call.1} parent=31 // pred_check
          %p361 = pneg %p115
        $region50: #{tpu_custom_call.1} parent=31 // pred_check_branch
          %363 = sbr.rel (%p361) target = $region52
        $region51: #{tpu_custom_call.1} parent=31 // pred_region
          %s364 = smul.u32 2, %s21
          %366 = vsyncadd [#allocation4], 0
          %s367 = smul.addr %s364, 8
          %s368 = scalar_lea.hbm %s3, %s367
          %s369 = sshll.u32 [#allocation8], 4
          %s370 = int_to_ptr.vmem [resolvable:$true] %s369
          %s371 = sshll.u32 %s368, 4
          %s372 = int_to_ptr.hbm [resolvable:$true] %s371
          %377 = dma.vmem_to_hbm [thread:$0]  %s370, 256, %s372, [#allocation4], 128, 128, 8
        $region52: #{tpu_custom_call.1} parent=31 // pred_fallthru
          _
        // Predicated region
        $region53: #{tpu_custom_call.1} parent=31 // pred_check
          %p378 = pneg %p115
        $region54: #{tpu_custom_call.1} parent=31 // pred_check_branch
          %380 = sbr.rel (%p378) target = $region56
        $region55: #{tpu_custom_call.1} parent=31 // pred_region
          %382 = dma.done [#allocation4], 256
        $region56: #{tpu_custom_call.1} parent=31 // pred_fallthru
          _
      $region32: #{tpu_custom_call.1} parent=5 // pred_fallthru
        _
      %p383 = scmp.le.s32.totalorder 2, %s12
      // Predicated region
      $region57: #{tpu_custom_call.1} parent=5 // pred_check
        %p384 = pneg %p383
      $region58: #{tpu_custom_call.1} parent=5 // pred_check_branch
        %386 = sbr.rel (%p384) target = $region60
      $region59: #{tpu_custom_call.1} parent=5 // pred_region
        %s387 = ssub.s32 %s12, 2
      $region60: #{tpu_custom_call.1} parent=5 // pred_fallthru
        _
    $region6: #{tpu_custom_call.1} parent=1 // loop_footer
      %s16 = sadd.s32 1, %s12
    $region7: #{tpu_custom_call.1} parent=1 // loop_footer_branch
      %11 = sbr.rel target = $region3
    $region8: #{tpu_custom_call.1} parent=1 // loop_exit
      _
    %388 = vsyncpa [#allocation3], 1
    %s389 = scalar_lea.sflag [#allocation3], 1
    %390 = vsyncpa %s389, 1
    %391 = vsyncpa [#allocation6], 1
    %392 = vsyncpa [#allocation4], 1
    %s393 = scalar_lea.sflag [#allocation4], 1
    %394 = vsyncpa %s393, 1

</llo_original>
